<compile_context>
chip_gen: v7x
topology: tpu7x:2x2x1
jax: 0.10.0
libtpu: 0.0.40
codegen_flags: <defaults>
</compile_context>

<pallas_src>
import functools
import numpy as np
import jax
import jax.numpy as jnp
from jax.experimental import pallas as pl
from jax.experimental.pallas import tpu as pltpu

MIN_TILE_B = 128    # lane width
MAX_TILE_B = 2048   # amortizes per-step overhead; activations stay tiny in VMEM


def _pick_tiling(batch):
    """(tile_b, b_pad): biggest tile <= MAX_TILE_B, but keep >=2 grid steps
    whenever the batch allows it so both v7x TensorCores get work."""
    b128 = ((batch + MIN_TILE_B - 1) // MIN_TILE_B) * MIN_TILE_B
    if b128 <= MIN_TILE_B:
        tile = MIN_TILE_B
    else:
        half = ((b128 // 2 + MIN_TILE_B - 1) // MIN_TILE_B) * MIN_TILE_B
        tile = min(MAX_TILE_B, half)
    b_pad = ((b128 + tile - 1) // tile) * tile
    return tile, b_pad


# ---------------------------------------------------------------------------
# Fused kernel: dual-tower Conv1d + ReLU + MaxPool2d((k,1)) + Linear + ReLU
#               + FactorizationMachine over [emb | user_text | item_text].
# All tensors are transposed: (features, batch_tile); batch on lanes.
# ---------------------------------------------------------------------------
def deepconn_kernel(patch_ref, emb_ref, wconv_ref, bconv_ref, w1_ref, b1_ref,
                    vaug_e_ref, vaug_t_ref, v2sq_e_ref, v2sq_t_ref, fmb_ref,
                    out_ref, *, ksize, slab, latent):
    # Dual Conv1d as one block-diagonal matmul (bf16 operands, f32 accum).
    h = jnp.dot(wconv_ref[...], patch_ref[...],
                preferred_element_type=jnp.float32)                # (2*out_pad, TB)
    h = jnp.maximum(h + bconv_ref[...], 0.0)

    # MaxPool2d((k,1)) over conv channels.  Channels are packed tap-major for
    # both towers jointly, so each pooling step is an aligned sublane slab.
    pooled = h[0:slab, :]                                          # (2*G_pad, TB)
    for t in range(1, ksize):
        pooled = jnp.maximum(pooled, h[t * slab:(t + 1) * slab, :])

    # Linear(G -> conv_1d_out_dim) for both towers (block-diagonal) + ReLU.
    txt = jnp.dot(w1_ref[...], pooled.astype(jnp.bfloat16),
                  preferred_element_type=jnp.float32)
    txt = jnp.maximum(txt + b1_ref[...], 0.0)                      # (2*C1, TB) f32

    # Factorization machine (transposed, f32).  vaug = [v^T ; w] split per
    # feature group so the FM linear term rides the same matmuls and no
    # [emb | txt] concat/copy is materialized.
    emb = emb_ref[...]                                             # (2E, TB) f32
    a = (jnp.dot(vaug_e_ref[...], emb, preferred_element_type=jnp.float32)
         + jnp.dot(vaug_t_ref[...], txt, preferred_element_type=jnp.float32))
    s = a[0:latent, :]                                             # (x @ v)^T
    lin = a[latent:latent + 1, :]                                  # (x @ w^T)^T
    # sum_f (x^2 @ v^2)_f  ==  x^2 @ rowsum(v^2)  (precomputed, split per group).
    sos = (jnp.sum(v2sq_e_ref[...] * (emb * emb), axis=0, keepdims=True)
           + jnp.sum(v2sq_t_ref[...] * (txt * txt), axis=0, keepdims=True))
    pair = jnp.sum(s * s, axis=0, keepdims=True) - sos             # (1, TB)
    out_ref[...] = lin + fmb_ref[0] + 0.5 * pair                   # lane-dense store


# ---------------------------------------------------------------------------
# Parameter packing (one-time): block-diagonal dual-tower weights, tap-major
# conv channel order (slab padded to 8), padded-tap removal, FM weight folded
# into v^T (split per feature group), rowsum(v*v), bf16 MXU conv/linear weights.
# ---------------------------------------------------------------------------
def pack_params(params):
    ksize = params["ksize"]
    conv_w_u, conv_b_u, lin_w_u, lin_b_u = params["cnn_u"]
    conv_w_i, conv_b_i, lin_w_i, lin_b_i = params["cnn_i"]
    out_dim, word_dim, _ = conv_w_u.shape
    G = out_dim // ksize
    C1 = lin_w_u.shape[0]

    # Tap reduction: the module's reshape/concat requires conv output length 1,
    # so the effective (unpadded) sequence length is L = ksize - 2*pad and only
    # taps [pad, pad+L) ever see real data.  Keep only those weight columns.
    pad = (ksize - 1) // 2
    L = ksize - 2 * pad
    Ck = word_dim * L
    keep_cols = (np.arange(word_dim)[:, None] * ksize
                 + (pad + np.arange(L))[None, :]).reshape(-1)

    # Pooling-slab alignment: pad window groups so slab = 2*G_pad is a multiple
    # of 8 (dummy channels have zero weight/bias; their w1 columns are zero).
    G_pad = ((G + 3) // 4) * 4
    out_pad = G_pad * ksize

    # Conv channel c pools into window g = c // k at tap t = c % k.  Combined
    # (both towers) row index: t*(2*G_pad) + tower*G_pad + g  -> pooling slabs
    # of width 2*G_pad are contiguous and sublane-aligned; pooled rows come out
    # as [user g-major | item g-major].
    def rows(tower):
        c = np.arange(out_dim)
        return (c % ksize) * (2 * G_pad) + tower * G_pad + c // ksize

    ru, ri = rows(0), rows(1)
    wconv = jnp.zeros((2 * out_pad, 2 * Ck), jnp.float32)
    wconv = wconv.at[ru, :Ck].set(
        conv_w_u.reshape(out_dim, word_dim * ksize)[:, keep_cols])
    wconv = wconv.at[ri, Ck:].set(
        conv_w_i.reshape(out_dim, word_dim * ksize)[:, keep_cols])
    bconv = jnp.zeros((2 * out_pad, 1), jnp.float32)
    bconv = bconv.at[ru, 0].set(conv_b_u)
    bconv = bconv.at[ri, 0].set(conv_b_i)

    w1 = jnp.zeros((2 * C1, 2 * G_pad), jnp.float32)
    w1 = w1.at[:C1, :G].set(lin_w_u)
    w1 = w1.at[C1:, G_pad:G_pad + G].set(lin_w_i)
    b1 = jnp.concatenate([lin_b_u, lin_b_i]).reshape(2 * C1, 1)

    fm_v, fm_w, fm_b = params["fm_v"], params["fm_w"], params["fm_b"]
    D, _latent = fm_v.shape
    embD = D - 2 * C1
    vaug = jnp.concatenate([fm_v.T, fm_w.reshape(1, D)], axis=0)   # (latent+1, D)
    v2sq = jnp.sum(fm_v * fm_v, axis=1).reshape(D, 1)              # (D, 1)

    return dict(
        wconv=wconv.astype(jnp.bfloat16), bconv=bconv,
        w1=w1.astype(jnp.bfloat16), b1=b1,
        vaug_e=vaug[:, :embD], vaug_t=vaug[:, embD:],              # f32 FM
        v2sq_e=v2sq[:embD], v2sq_t=v2sq[embD:],
        fmb=fm_b.reshape(1).astype(jnp.float32),
        emb_table=params["emb_table"], offsets=params["offsets"],
    )


def _text_T(vec, ksize):
    """vec: (B, word_dim, L) NCW -> bf16 transposed patches (word_dim*L, B).
    Zero-padded im2col taps are dropped, so this is just a cast + transpose."""
    B, word_dim, L = vec.shape
    pad = (ksize - 1) // 2
    # The module's reshape(-1, G) + batch concat is only shape-consistent when
    # the conv output length is 1.
    # TODO(synk): seq_len with conv output length > 1 is unsupported (matches
    # the PyTorch module's reshape semantics but is not surfaced to callers).
    assert L + 2 * pad - ksize + 1 == 1, \
        "CNN_1D requires conv output length 1 for DeepCoNN concat"
    return vec.astype(jnp.bfloat16).reshape(B, word_dim * L).T


# ---------------------------------------------------------------------------
# Forward
# ---------------------------------------------------------------------------
@functools.partial(jax.jit, static_argnames=("ksize",))
def deepconn_forward(packed, user_isbn_vector, user_text_vector,
                     item_text_vector, *, ksize):
    B = user_isbn_vector.shape[0]

    # FeaturesEmbedding: offsets + gather + flatten.
    # TODO(synk): embedding gather kept in plain JAX (tiny, data-dependent indexing).
    idx = user_isbn_vector + packed["offsets"][None, :]
    emb = packed["emb_table"][idx].reshape(B, -1)                  # (B, 2E)

    # bf16 before transpose/concat/pad: halves activation bytes & relayout traffic.
    patches = jnp.concatenate(
        [_text_T(user_text_vector, ksize), _text_T(item_text_vector, ksize)],
        axis=0)                                                    # (2*Ck, B) bf16
    emb_T = emb.T.astype(jnp.float32)                              # (2E, B) f32

    tile_b, b_pad = _pick_tiling(B)
    if b_pad != B:
        patches = jnp.pad(patches, ((0, 0), (0, b_pad - B)))
        emb_T = jnp.pad(emb_T, ((0, 0), (0, b_pad - B)))

    wconv, bconv = packed["wconv"], packed["bconv"]
    w1, b1 = packed["w1"], packed["b1"]
    vaug_e, vaug_t = packed["vaug_e"], packed["vaug_t"]
    v2sq_e, v2sq_t = packed["v2sq_e"], packed["v2sq_t"]
    fmb = packed["fmb"]

    slab = wconv.shape[0] // ksize          # = 2*G_pad (joint pooling slab width)
    latent = vaug_e.shape[0] - 1
    D = vaug_e.shape[1] + vaug_t.shape[1]
    twoCk = patches.shape[0]
    embD = emb_T.shape[0]

    flops = 2 * b_pad * (wconv.shape[0] * wconv.shape[1]
                         + w1.shape[0] * w1.shape[1]
                         + (latent + 1) * D) + 8 * b_pad * D
    bytes_accessed = int(patches.size * 2 + emb_T.size * 4 + b_pad * 4
                         + wconv.size * 2 + w1.size * 2
                         + (vaug_e.size + vaug_t.size) * 4
                         + bconv.size * 4 + b1.size * 4
                         + (v2sq_e.size + v2sq_t.size) * 4 + 4)

    kernel = functools.partial(deepconn_kernel, ksize=ksize, slab=slab,
                               latent=latent)
    out = pl.pallas_call(
        kernel,
        out_shape=jax.ShapeDtypeStruct((1, b_pad), jnp.float32),
        grid=(b_pad // tile_b,),
        in_specs=[
            pl.BlockSpec((twoCk, tile_b), lambda i: (0, i)),       # patches (tiled, bf16)
            pl.BlockSpec((embD, tile_b), lambda i: (0, i)),        # emb features (tiled)
            pl.BlockSpec(wconv.shape, lambda i: (0, 0)),           # resident weights
            pl.BlockSpec(bconv.shape, lambda i: (0, 0)),
            pl.BlockSpec(w1.shape, lambda i: (0, 0)),
            pl.BlockSpec(b1.shape, lambda i: (0, 0)),
            pl.BlockSpec(vaug_e.shape, lambda i: (0, 0)),
            pl.BlockSpec(vaug_t.shape, lambda i: (0, 0)),
            pl.BlockSpec(v2sq_e.shape, lambda i: (0, 0)),
            pl.BlockSpec(v2sq_t.shape, lambda i: (0, 0)),
            pl.BlockSpec(memory_space=pltpu.MemorySpace.SMEM),     # FM bias scalar
        ],
        out_specs=pl.BlockSpec((1, tile_b), lambda i: (0, i)),     # lane-dense (1, B)
        compiler_params=pltpu.CompilerParams(
            dimension_semantics=("parallel",)),
        cost_estimate=pl.CostEstimate(flops=flops, transcendentals=0,
                                      bytes_accessed=bytes_accessed),
    )(patches, emb_T, wconv, bconv, w1, b1, vaug_e, vaug_t, v2sq_e, v2sq_t, fmb)

    return out[0, :B]                                              # squeeze(1)


# ---------------------------------------------------------------------------
# Pure-JAX reference (mirrors the PyTorch module, f32) for validation.
# ---------------------------------------------------------------------------
def deepconn_reference(params, user_isbn_vector, user_text_vector,
                       item_text_vector):
    ksize = params["ksize"]

    def cnn(vec, conv_w, conv_b, lin_w, lin_b):
        B, word_dim, L = vec.shape
        pad = (ksize - 1) // 2
        xp = jnp.pad(vec, ((0, 0), (0, 0), (pad, pad)))
        L_out = L + 2 * pad - ksize + 1
        out_dim = conv_w.shape[0]
        cols = []
        for p in range(L_out):
            patch = xp[:, :, p:p + ksize].reshape(B, -1)
            cols.append(patch @ conv_w.reshape(out_dim, -1).T + conv_b)
        conv = jnp.maximum(jnp.stack(cols, axis=-1), 0.0)          # (B, out_dim, L_out)
        G = out_dim // ksize
        pooled = conv.reshape(B, G, ksize, L_out).max(axis=2)      # MaxPool2d((k,1))
        pooled = pooled.reshape(-1, G)
        return jnp.maximum(pooled @ lin_w.T + lin_b, 0.0)

    B = user_isbn_vector.shape[0]
    idx = user_isbn_vector + params["offsets"][None, :]
    emb = params["emb_table"][idx].reshape(B, -1)
    u_txt = cnn(user_text_vector, *params["cnn_u"])
    i_txt = cnn(item_text_vector, *params["cnn_i"])
    x = jnp.concatenate([emb, u_txt, i_txt], axis=1)
    v, w, b = params["fm_v"], params["fm_w"], params["fm_b"]
    linear = x @ w.T + b
    sq_sum = (x @ v) ** 2
    sum_sq = (x ** 2) @ (v ** 2)
    pair = jnp.sum(sq_sum - sum_sq, axis=1, keepdims=True)
    return (linear + 0.5 * pair)[:, 0]


# ---------------------------------------------------------------------------
# Deterministic parameter construction + demo
# ---------------------------------------------------------------------------
def make_params(key, *, word_dim, out_dim, ksize, conv_1d_out_dim,
                field_dims, embed_dim, latent_dim):
    keys = jax.random.split(key, 12)
    G = out_dim // ksize
    fm_in = 2 * conv_1d_out_dim + embed_dim * len(field_dims)

    def unif(k, shape, scale=0.1):
        return jax.random.uniform(k, shape, jnp.float32, -scale, scale)

    cnn_u = (unif(keys[0], (out_dim, word_dim, ksize)), unif(keys[1], (out_dim,)),
             unif(keys[2], (conv_1d_out_dim, G)), unif(keys[3], (conv_1d_out_dim,)))
    cnn_i = (unif(keys[4], (out_dim, word_dim, ksize)), unif(keys[5], (out_dim,)),
             unif(keys[6], (conv_1d_out_dim, G)), unif(keys[7], (conv_1d_out_dim,)))
    emb_table = unif(keys[8], (int(np.sum(field_dims)), embed_dim), 0.5)
    fm_v = jax.random.uniform(keys[9], (fm_in, latent_dim), jnp.float32)  # torch.rand
    fm_w = unif(keys[10], (1, fm_in))
    fm_b = unif(keys[11], (1,))
    offsets = jnp.array((0, *np.cumsum(field_dims)[:-1]), dtype=jnp.int32)
    return dict(cnn_u=cnn_u, cnn_i=cnn_i, emb_table=emb_table, offsets=offsets,
                fm_v=fm_v, fm_w=fm_w, fm_b=fm_b, ksize=ksize)


if __name__ == "__main__":
    B = 8
    word_dim = 16
    out_dim = 12
    ksize = 3
    conv_1d_out_dim = 8
    embed_dim = 4
    latent_dim = 8
    field_dims = np.array([7, 11], dtype=np.int64)   # len(user2idx), len(isbn2idx)
    seq_len = 1   # conv output length must be 1 (see reshape/concat in the module)

    root = jax.random.PRNGKey(0)
    kp, k1, k2, k3 = jax.random.split(root, 4)
    params = make_params(kp, word_dim=word_dim, out_dim=out_dim, ksize=ksize,
                         conv_1d_out_dim=conv_1d_out_dim, field_dims=field_dims,
                         embed_dim=embed_dim, latent_dim=latent_dim)
    packed = pack_params(params)

    user_isbn_vector = jax.random.randint(
        k1, (B, 2), minval=0, maxval=jnp.array(field_dims, dtype=jnp.int32),
        dtype=jnp.int32)
    user_text_vector = jax.random.normal(k2, (B, word_dim, seq_len), jnp.float32)
    item_text_vector = jax.random.normal(k3, (B, word_dim, seq_len), jnp.float32)

    out = deepconn_forward(packed, user_isbn_vector, user_text_vector,
                           item_text_vector, ksize=ksize)
    out = jax.block_until_ready(out)
    assert out.shape == (B,) and out.dtype == jnp.float32

    ref = deepconn_reference(params, user_isbn_vector, user_text_vector,
                             item_text_vector)
    np.testing.assert_allclose(np.asarray(out), np.asarray(ref),
                               rtol=5e-2, atol=1e-1)
    print("KERNEL_OK")
</pallas_src>

<mosaic_0001>
module attributes {stable_mosaic.version = 11 : i64} {
  func.func @deepconn_kernel(%arg0: i32, %arg1: memref<32x128xbf16, #tpu.memory_space<vmem>>, %arg2: memref<8x128xf32, #tpu.memory_space<vmem>>, %arg3: memref<24x32xbf16, #tpu.memory_space<vmem>>, %arg4: memref<24x1xf32, #tpu.memory_space<vmem>>, %arg5: memref<16x8xbf16, #tpu.memory_space<vmem>>, %arg6: memref<16x1xf32, #tpu.memory_space<vmem>>, %arg7: memref<9x8xf32, #tpu.memory_space<vmem>>, %arg8: memref<9x16xf32, #tpu.memory_space<vmem>>, %arg9: memref<8x1xf32, #tpu.memory_space<vmem>>, %arg10: memref<16x1xf32, #tpu.memory_space<vmem>>, %arg11: memref<1xf32, #tpu.memory_space<smem>>, %arg12: memref<1x128xf32, #tpu.memory_space<vmem>>) attributes {dimension_semantics = [#tpu.dimension_semantics<parallel>], iteration_bounds = array<i64: 1>, scalar_prefetch = 0 : i64, scratch_operands = 0 : i64, tpu.core_type = #tpu.core_type<tc>, window_params = [{transform_indices = @transform_0, window_bounds = array<i64: 32, 128>}, {transform_indices = @transform_1, window_bounds = array<i64: 8, 128>}, {pipeline_mode = #tpu.pipeline_mode<synchronous>, transform_indices = @transform_2, window_bounds = array<i64: 24, 32>}, {pipeline_mode = #tpu.pipeline_mode<synchronous>, transform_indices = @transform_3, window_bounds = array<i64: 24, 1>}, {pipeline_mode = #tpu.pipeline_mode<synchronous>, transform_indices = @transform_4, window_bounds = array<i64: 16, 8>}, {pipeline_mode = #tpu.pipeline_mode<synchronous>, transform_indices = @transform_5, window_bounds = array<i64: 16, 1>}, {pipeline_mode = #tpu.pipeline_mode<synchronous>, transform_indices = @transform_6, window_bounds = array<i64: 9, 8>}, {pipeline_mode = #tpu.pipeline_mode<synchronous>, transform_indices = @transform_7, window_bounds = array<i64: 9, 16>}, {pipeline_mode = #tpu.pipeline_mode<synchronous>, transform_indices = @transform_8, window_bounds = array<i64: 8, 1>}, {pipeline_mode = #tpu.pipeline_mode<synchronous>, transform_indices = @transform_9, window_bounds = array<i64: 16, 1>}, {transform_indices = @transform_10, window_bounds = array<i64: 1>}, {transform_indices = @transform_11, window_bounds = array<i64: 1, 128>}]} {
    %c0 = arith.constant 0 : index
    %c0_0 = arith.constant 0 : index
    %0 = vector.load %arg3[%c0, %c0_0] : memref<24x32xbf16, #tpu.memory_space<vmem>>, vector<24x32xbf16>
    %c0_1 = arith.constant 0 : index
    %c0_2 = arith.constant 0 : index
    %1 = vector.load %arg1[%c0_1, %c0_2] : memref<32x128xbf16, #tpu.memory_space<vmem>>, vector<32x128xbf16>
    %cst = arith.constant dense<0.000000e+00> : vector<24x128xf32>
    %2 = tpu.matmul %0, %1, %cst {dimension_numbers = #tpu.dot_dimension_numbers<[1], [0], [0], [1], [0, 0, 1, 1], [], []>} : vector<24x32xbf16>, vector<32x128xbf16>, vector<24x128xf32> -> vector<24x128xf32>
    %c0_3 = arith.constant 0 : index
    %c0_4 = arith.constant 0 : index
    %3 = vector.load %arg4[%c0_3, %c0_4] : memref<24x1xf32, #tpu.memory_space<vmem>>, vector<24x1xf32>
    %4 = vector.broadcast %3 : vector<24x1xf32> to vector<24x128xf32>
    %5 = arith.addf %2, %4 : vector<24x128xf32>
    %cst_5 = arith.constant 0.000000e+00 : f32
    %6 = vector.broadcast %cst_5 : f32 to vector<24x128xf32>
    %7 = arith.maximumf %5, %6 : vector<24x128xf32>
    %8 = vector.extract_strided_slice %7 {offsets = [0, 0], sizes = [8, 128], strides = [1, 1]} : vector<24x128xf32> to vector<8x128xf32>
    %9 = vector.extract_strided_slice %7 {offsets = [8, 0], sizes = [8, 128], strides = [1, 1]} : vector<24x128xf32> to vector<8x128xf32>
    %10 = arith.maximumf %8, %9 : vector<8x128xf32>
    %11 = vector.extract_strided_slice %7 {offsets = [16, 0], sizes = [8, 128], strides = [1, 1]} : vector<24x128xf32> to vector<8x128xf32>
    %12 = arith.maximumf %10, %11 : vector<8x128xf32>
    %c0_6 = arith.constant 0 : index
    %c0_7 = arith.constant 0 : index
    %13 = vector.load %arg5[%c0_6, %c0_7] : memref<16x8xbf16, #tpu.memory_space<vmem>>, vector<16x8xbf16>
    %14 = arith.truncf %12 : vector<8x128xf32> to vector<8x128xbf16>
    %cst_8 = arith.constant dense<0.000000e+00> : vector<16x128xf32>
    %15 = tpu.matmul %13, %14, %cst_8 {dimension_numbers = #tpu.dot_dimension_numbers<[1], [0], [0], [1], [0, 0, 1, 1], [], []>} : vector<16x8xbf16>, vector<8x128xbf16>, vector<16x128xf32> -> vector<16x128xf32>
    %c0_9 = arith.constant 0 : index
    %c0_10 = arith.constant 0 : index
    %16 = vector.load %arg6[%c0_9, %c0_10] : memref<16x1xf32, #tpu.memory_space<vmem>>, vector<16x1xf32>
    %17 = vector.broadcast %16 : vector<16x1xf32> to vector<16x128xf32>
    %18 = arith.addf %15, %17 : vector<16x128xf32>
    %cst_11 = arith.constant 0.000000e+00 : f32
    %19 = vector.broadcast %cst_11 : f32 to vector<16x128xf32>
    %20 = arith.maximumf %18, %19 : vector<16x128xf32>
    %c0_12 = arith.constant 0 : index
    %c0_13 = arith.constant 0 : index
    %21 = vector.load %arg2[%c0_12, %c0_13] : memref<8x128xf32, #tpu.memory_space<vmem>>, vector<8x128xf32>
    %c0_14 = arith.constant 0 : index
    %c0_15 = arith.constant 0 : index
    %22 = vector.load %arg7[%c0_14, %c0_15] : memref<9x8xf32, #tpu.memory_space<vmem>>, vector<9x8xf32>
    %cst_16 = arith.constant dense<0.000000e+00> : vector<9x128xf32>
    %23 = tpu.matmul %22, %21, %cst_16 {dimension_numbers = #tpu.dot_dimension_numbers<[1], [0], [0], [1], [0, 0, 1, 1], [], []>} : vector<9x8xf32>, vector<8x128xf32>, vector<9x128xf32> -> vector<9x128xf32>
    %c0_17 = arith.constant 0 : index
    %c0_18 = arith.constant 0 : index
    %24 = vector.load %arg8[%c0_17, %c0_18] : memref<9x16xf32, #tpu.memory_space<vmem>>, vector<9x16xf32>
    %cst_19 = arith.constant dense<0.000000e+00> : vector<9x128xf32>
    %25 = tpu.matmul %24, %20, %cst_19 {dimension_numbers = #tpu.dot_dimension_numbers<[1], [0], [0], [1], [0, 0, 1, 1], [], []>} : vector<9x16xf32>, vector<16x128xf32>, vector<9x128xf32> -> vector<9x128xf32>
    %26 = arith.addf %23, %25 : vector<9x128xf32>
    %27 = vector.extract_strided_slice %26 {offsets = [0, 0], sizes = [8, 128], strides = [1, 1]} : vector<9x128xf32> to vector<8x128xf32>
    %28 = vector.extract_strided_slice %26 {offsets = [8, 0], sizes = [1, 128], strides = [1, 1]} : vector<9x128xf32> to vector<1x128xf32>
    %c0_20 = arith.constant 0 : index
    %c0_21 = arith.constant 0 : index
    %29 = vector.load %arg9[%c0_20, %c0_21] : memref<8x1xf32, #tpu.memory_space<vmem>>, vector<8x1xf32>
    %30 = arith.mulf %21, %21 : vector<8x128xf32>
    %31 = vector.broadcast %29 : vector<8x1xf32> to vector<8x128xf32>
    %32 = arith.mulf %31, %30 : vector<8x128xf32>
    %cst_22 = arith.constant dense<0.000000e+00> : vector<128xf32>
    %33 = vector.multi_reduction <add>, %32, %cst_22 [0] : vector<8x128xf32> to vector<128xf32>
    %34 = vector.shape_cast %33 : vector<128xf32> to vector<1x128xf32>
    %c0_23 = arith.constant 0 : index
    %c0_24 = arith.constant 0 : index
    %35 = vector.load %arg10[%c0_23, %c0_24] : memref<16x1xf32, #tpu.memory_space<vmem>>, vector<16x1xf32>
    %36 = arith.mulf %20, %20 : vector<16x128xf32>
    %37 = vector.broadcast %35 : vector<16x1xf32> to vector<16x128xf32>
    %38 = arith.mulf %37, %36 : vector<16x128xf32>
    %cst_25 = arith.constant dense<0.000000e+00> : vector<128xf32>
    %39 = vector.multi_reduction <add>, %38, %cst_25 [0] : vector<16x128xf32> to vector<128xf32>
    %40 = vector.shape_cast %39 : vector<128xf32> to vector<1x128xf32>
    %41 = arith.addf %34, %40 : vector<1x128xf32>
    %42 = arith.mulf %27, %27 : vector<8x128xf32>
    %cst_26 = arith.constant dense<0.000000e+00> : vector<128xf32>
    %43 = vector.multi_reduction <add>, %42, %cst_26 [0] : vector<8x128xf32> to vector<128xf32>
    %44 = vector.shape_cast %43 : vector<128xf32> to vector<1x128xf32>
    %45 = arith.subf %44, %41 : vector<1x128xf32>
    %c0_27 = arith.constant 0 : index
    %46 = memref.load %arg11[%c0_27] : memref<1xf32, #tpu.memory_space<smem>>
    %47 = vector.broadcast %46 : f32 to vector<1x128xf32>
    %48 = arith.addf %28, %47 : vector<1x128xf32>
    %cst_28 = arith.constant 5.000000e-01 : f32
    %49 = vector.broadcast %cst_28 : f32 to vector<1x128xf32>
    %50 = arith.mulf %49, %45 : vector<1x128xf32>
    %51 = arith.addf %48, %50 : vector<1x128xf32>
    %c0_29 = arith.constant 0 : index
    %c0_30 = arith.constant 0 : index
    %52 = vector.load %arg12[%c0_29, %c0_30] : memref<1x128xf32, #tpu.memory_space<vmem>>, vector<1x128xf32>
    tpu.vector_store %arg12[%c0_29, %c0_30], %51 {strides = array<i32>} : memref<1x128xf32, #tpu.memory_space<vmem>>, vector<1x128xf32>,
    return
  }
  func.func @transform_0(%arg0: i32) -> (i32, i32) {
    %c0_i32 = arith.constant 0 : i32
    %c0_i32_0 = arith.constant 0 : i32
    return %c0_i32, %arg0 : i32, i32
  }
  func.func @transform_1(%arg0: i32) -> (i32, i32) {
    %c0_i32 = arith.constant 0 : i32
    %c0_i32_0 = arith.constant 0 : i32
    return %c0_i32, %arg0 : i32, i32
  }
  func.func @transform_2(%arg0: i32) -> (i32, i32) {
    %c0_i32 = arith.constant 0 : i32
    %c0_i32_0 = arith.constant 0 : i32
    %c0_i32_1 = arith.constant 0 : i32
    return %c0_i32, %c0_i32_0 : i32, i32
  }
  func.func @transform_3(%arg0: i32) -> (i32, i32) {
    %c0_i32 = arith.constant 0 : i32
    %c0_i32_0 = arith.constant 0 : i32
    %c0_i32_1 = arith.constant 0 : i32
    return %c0_i32, %c0_i32_0 : i32, i32
  }
  func.func @transform_4(%arg0: i32) -> (i32, i32) {
    %c0_i32 = arith.constant 0 : i32
    %c0_i32_0 = arith.constant 0 : i32
    %c0_i32_1 = arith.constant 0 : i32
    return %c0_i32, %c0_i32_0 : i32, i32
  }
  func.func @transform_5(%arg0: i32) -> (i32, i32) {
    %c0_i32 = arith.constant 0 : i32
    %c0_i32_0 = arith.constant 0 : i32
    %c0_i32_1 = arith.constant 0 : i32
    return %c0_i32, %c0_i32_0 : i32, i32
  }
  func.func @transform_6(%arg0: i32) -> (i32, i32) {
    %c0_i32 = arith.constant 0 : i32
    %c0_i32_0 = arith.constant 0 : i32
    %c0_i32_1 = arith.constant 0 : i32
    return %c0_i32, %c0_i32_0 : i32, i32
  }
  func.func @transform_7(%arg0: i32) -> (i32, i32) {
    %c0_i32 = arith.constant 0 : i32
    %c0_i32_0 = arith.constant 0 : i32
    %c0_i32_1 = arith.constant 0 : i32
    return %c0_i32, %c0_i32_0 : i32, i32
  }
  func.func @transform_8(%arg0: i32) -> (i32, i32) {
    %c0_i32 = arith.constant 0 : i32
    %c0_i32_0 = arith.constant 0 : i32
    %c0_i32_1 = arith.constant 0 : i32
    return %c0_i32, %c0_i32_0 : i32, i32
  }
  func.func @transform_9(%arg0: i32) -> (i32, i32) {
    %c0_i32 = arith.constant 0 : i32
    %c0_i32_0 = arith.constant 0 : i32
    %c0_i32_1 = arith.constant 0 : i32
    return %c0_i32, %c0_i32_0 : i32, i32
  }
  func.func @transform_10(%arg0: i32) -> i32 {
    %c0_i32 = arith.constant 0 : i32
    %c0_i32_0 = arith.constant 0 : i32
    return %c0_i32 : i32
  }
  func.func @transform_11(%arg0: i32) -> (i32, i32) {
    %c0_i32 = arith.constant 0 : i32
    %c0_i32_0 = arith.constant 0 : i32
    return %c0_i32, %arg0 : i32, i32
  }
}

</mosaic_0001>

<llo_original>
// kernel: deepconn_forward.1
$region0: #{deepconn_forward.1}
  #allocation0 [shape = 'u32[]', space=smem, size = 0x4, offset = 0x4, fixed_abs, tag = 'smem constant byte address 0x4 - core index']
  #allocation1 [shape = 'u32[144,128]{1,0:T(1,128)}', space=vmem, size = 0x12000, scoped, tag = 'internal scratch']
  #allocation2 [shape = 'f32[1]{0:T(128)S(6)}', space=smem, size = 0x200, scoped, tag = 'scoped memory for deepconn_forward.1']
  %s0 = inlined_call_operand.vmem [shape: bf16[32,128], index: 0, kind: input, shape index: {}]
  %s1 = inlined_call_operand.vmem [shape: f32[8,128], index: 1, kind: input, shape index: {}]
  %s2 = inlined_call_operand.vmem [shape: bf16[24,32], index: 2, kind: input, shape index: {}]
  %s3 = inlined_call_operand.vmem [shape: f32[24,1], index: 3, kind: input, shape index: {}]
  %s4 = inlined_call_operand.vmem [shape: bf16[16,8], index: 4, kind: input, shape index: {}]
  %s5 = inlined_call_operand.vmem [shape: f32[16,1], index: 5, kind: input, shape index: {}]
  %s6 = inlined_call_operand.vmem [shape: f32[9,8], index: 6, kind: input, shape index: {}]
  %s7 = inlined_call_operand.vmem [shape: f32[9,16], index: 7, kind: input, shape index: {}]
  %s8 = inlined_call_operand.vmem [shape: f32[8,1], index: 8, kind: input, shape index: {}]
  %s9 = inlined_call_operand.vmem [shape: f32[16,1], index: 9, kind: input, shape index: {}]
  %s10 = inlined_call_operand.<no memory space> [shape: f32[1], index: 10, kind: input, shape index: {}]
  %s11 = inlined_call_operand.vmem [shape: f32[1,128], index: 11, kind: output, shape index: {}]
  %s12 = sld [smem:[#allocation0]]
  $region54: #{deepconn_forward.1} parent=0
    _
  %s14 = ssub.s32 1, %s12
  %s15 = scalar_select 0, %s14, %s12
  %16 = sst [smem:[#allocation2]] %s10
  // Predicated region
  $region2: #{deepconn_forward.1} parent=0 // pred_check
    _
  $region3: #{deepconn_forward.1} parent=0 // pred_check_branch
    %18 = sbr.rel (0) target = $region5
  $region4: #{deepconn_forward.1} parent=0 // pred_region
    _
  $region5: #{deepconn_forward.1} parent=0 // pred_fallthru
    _
  // Predicated region
  $region6: #{deepconn_forward.1} parent=0 // pred_check
    _
  $region7: #{deepconn_forward.1} parent=0 // pred_check_branch
    %20 = sbr.rel (0) target = $region9
  $region8: #{deepconn_forward.1} parent=0 // pred_region
    _
  $region9: #{deepconn_forward.1} parent=0 // pred_fallthru
    _
  // Predicated region
  $region10: #{deepconn_forward.1} parent=0 // pred_check
    _
  $region11: #{deepconn_forward.1} parent=0 // pred_check_branch
    %22 = sbr.rel (0) target = $region13
  $region12: #{deepconn_forward.1} parent=0 // pred_region
    _
  $region13: #{deepconn_forward.1} parent=0 // pred_fallthru
    _
  // Predicated region
  $region14: #{deepconn_forward.1} parent=0 // pred_check
    _
  $region15: #{deepconn_forward.1} parent=0 // pred_check_branch
    %24 = sbr.rel (0) target = $region17
  $region16: #{deepconn_forward.1} parent=0 // pred_region
    _
  $region17: #{deepconn_forward.1} parent=0 // pred_fallthru
    _
  // Predicated region
  $region18: #{deepconn_forward.1} parent=0 // pred_check
    _
  $region19: #{deepconn_forward.1} parent=0 // pred_check_branch
    %26 = sbr.rel (0) target = $region21
  $region20: #{deepconn_forward.1} parent=0 // pred_region
    _
  $region21: #{deepconn_forward.1} parent=0 // pred_fallthru
    _
  // Predicated region
  $region22: #{deepconn_forward.1} parent=0 // pred_check
    _
  $region23: #{deepconn_forward.1} parent=0 // pred_check_branch
    %28 = sbr.rel (0) target = $region25
  $region24: #{deepconn_forward.1} parent=0 // pred_region
    _
  $region25: #{deepconn_forward.1} parent=0 // pred_fallthru
    _
  // Predicated region
  $region26: #{deepconn_forward.1} parent=0 // pred_check
    _
  $region27: #{deepconn_forward.1} parent=0 // pred_check_branch
    %30 = sbr.rel (0) target = $region29
  $region28: #{deepconn_forward.1} parent=0 // pred_region
    _
  $region29: #{deepconn_forward.1} parent=0 // pred_fallthru
    _
  // Predicated region
  $region30: #{deepconn_forward.1} parent=0 // pred_check
    _
  $region31: #{deepconn_forward.1} parent=0 // pred_check_branch
    %32 = sbr.rel (0) target = $region33
  $region32: #{deepconn_forward.1} parent=0 // pred_region
    _
  $region33: #{deepconn_forward.1} parent=0 // pred_fallthru
    _
  // Predicated region
  $region34: #{deepconn_forward.1} parent=0 // pred_check
    _
  $region35: #{deepconn_forward.1} parent=0 // pred_check_branch
    %34 = sbr.rel (0) target = $region37
  $region36: #{deepconn_forward.1} parent=0 // pred_region
    _
  $region37: #{deepconn_forward.1} parent=0 // pred_fallthru
    _
  // Predicated region
  $region38: #{deepconn_forward.1} parent=0 // pred_check
    _
  $region39: #{deepconn_forward.1} parent=0 // pred_check_branch
    %36 = sbr.rel (0) target = $region41
  $region40: #{deepconn_forward.1} parent=0 // pred_region
    _
  $region41: #{deepconn_forward.1} parent=0 // pred_fallthru
    _
  // Predicated region
  $region42: #{deepconn_forward.1} parent=0 // pred_check
    _
  $region43: #{deepconn_forward.1} parent=0 // pred_check_branch
    %38 = sbr.rel (0) target = $region45
  $region44: #{deepconn_forward.1} parent=0 // pred_region
    _
  $region45: #{deepconn_forward.1} parent=0 // pred_fallthru
    _
  %v40 = vld [vmem:[%s2] sm:$0xf]
  %v41 = vld [vmem:[%s2 + $0x4] sm:$0xf]
  %v42 = vld [vmem:[%s2 + $0x8] sm:$0xf]
  %v43 = vld [vmem:[%s0] sm:$0xf]
  %v44 = vld [vmem:[%s0 + $0x4] sm:$0xf]
  %v45 = vld [vmem:[%s0 + $0x8] sm:$0xf]
  %v46 = vld [vmem:[%s0 + $0xc] sm:$0xf]
  %v47 = vld [vmem:[%s3] sm:$0xff]
  %v48 = vld [vmem:[%s3 + $0x8] sm:$0xff]
  %v49 = vld [vmem:[%s3 + $0x10] sm:$0xff]
  %51 = vset.pattern.permute.xlu0 0
  %52 = vperm.xlu0 %51, %v47
  %v53 = vpop.permute.xlu0 %52
  %56 = vset.pattern.permute.xlu0 0
  %57 = vperm.xlu0 %56, %v48
  %v58 = vpop.permute.xlu0 %57
  %61 = vset.pattern.permute.xlu0 0
  %62 = vperm.xlu0 %61, %v49
  %v63 = vpop.permute.xlu0 %62
  %v68 = vunpack.c.l.b16 %v40
  %v69 = vunpack.c.l.b16 %v41
  %v70 = vunpack.c.l.b16 %v42
  %v71 = vpack.c.b16 %v69, %v68
  %v72 = vpack.c.b16 %v70, %v70
  %v77 = vunpack.c.l.b16 %v43
  %v78 = vunpack.c.l.b16 %v44
  %v79 = vunpack.c.l.b16 %v45
  %v80 = vunpack.c.l.b16 %v46
  %v81 = vpack.c.b16 %v78, %v77
  %v82 = vpack.c.b16 %v80, %v79
  %vm85 = vcmask 261120
  %v87 = vsel %vm85, %v71, 0
  %v90 = vsel %vm85, %v72, 0
  %92 = vmatprep.subr.bf16.mxu0 0
  %93 = vmatpush1.bf16.msra.mxu0 %v81
  %94 = vmatprep.subr.bf16.mxu0 0
  %95 = vmatpush1.bf16.msra.mxu0 %v82
  %96 = vmatprep.subr.bf16.mxu0 0
  %97 = vmatpush1.bf16.msra.mxu0 0
  %98 = vmatprep.subr.bf16.mxu0 0
  %99 = vmatpush1.bf16.msra.mxu0 0
  %100 = vmatprep.subr.bf16.mxu0 0
  %101 = vmatpush1.bf16.msra.mxu0 0
  %102 = vmatprep.subr.bf16.mxu0 0
  %103 = vmatpush1.bf16.msra.mxu0 0
  %104 = vmatprep.subr.bf16.mxu0 0
  %105 = vmatpush1.bf16.msra.mxu0 0
  %106 = vmatprep.subr.bf16.mxu0 0
  %107 = vmatpush1.bf16.msra.mxu0 0
  %108 = vmatprep.subr.bf16.mxu0 0
  %109 = vmatpush1.bf16.msra.mxu0 0
  %110 = vmatprep.subr.bf16.mxu0 0
  %111 = vmatpush1.bf16.msra.mxu0 0
  %112 = vmatprep.subr.bf16.mxu0 0
  %113 = vmatpush1.bf16.msra.mxu0 0
  %114 = vmatprep.subr.bf16.mxu0 0
  %115 = vmatpush1.bf16.msra.mxu0 0
  %116 = vmatprep.subr.bf16.mxu0 0
  %117 = vmatpush1.bf16.msra.mxu0 0
  %118 = vmatprep.subr.bf16.mxu0 0
  %119 = vmatpush1.bf16.msra.mxu0 0
  %120 = vmatprep.subr.bf16.mxu0 0
  %121 = vmatpush1.bf16.msra.mxu0 0
  %122 = vmatprep.subr.bf16.mxu0 0
  %123 = vmatpush1.bf16.msra.mxu0 0
  %124 = vmatprep.mubr.bf16.mxu0 0
  %125 = vmatmul.mubr.bf16.gmra.mrb[0].mxu0 %v87
  %v126 = vpop.f32.mrb[0].mxu0
  %v127 = vadd.f32 %v53, %v126
  %v128 = vpop.f32.mrb[0].mxu0
  %v129 = vpop.f32.mrb[0].mxu0
  %v130 = vadd.f32 %v58, %v129
  %v131 = vpop.f32.mrb[0].mxu0
  %132 = vmatprep.mubr.bf16.mxu0 0
  %133 = vmatmul.mubr.bf16.gmra.mrb[0].mxu0 %v90
  %v134 = vpop.f32.mrb[0].mxu0
  %v135 = vadd.f32 %v63, %v134
  %v136 = vpop.f32.mrb[0].mxu0
  %v137 = vpop.f32.mrb[0].mxu0
  %v138 = vpop.f32.mrb[0].mxu0
  %139 = vdwg.mxu0
  %v140 = vmax.f32 %v127, 0.0
  %v141 = vmax.f32 %v130, 0.0
  %v142 = vmax.f32 %v135, 0.0
  %v143 = vmax.f32 %v140, %v141
  %v144 = vmax.f32 %v143, %v142
  %v145 = vld [vmem:[%s4] sm:$0xf]
  %v146 = vld [vmem:[%s4 + $0x4] sm:$0xf]
  %v147 = vpack.c.bf16 %v144, %v144
  %v148 = vld [vmem:[%s5] sm:$0xff]
  %v149 = vld [vmem:[%s5 + $0x8] sm:$0xff]
  %151 = vset.pattern.permute.xlu0 0
  %152 = vperm.xlu0 %151, %v148
  %v153 = vpop.permute.xlu0 %152
  %156 = vset.pattern.permute.xlu0 0
  %157 = vperm.xlu0 %156, %v149
  %v158 = vpop.permute.xlu0 %157
  %v162 = vunpack.c.l.b16 %v145
  %v163 = vunpack.c.l.b16 %v146
  %v164 = vpack.c.b16 %v163, %v162
  %vm165 = vcmask 64512
  %v167 = vsel %vm165, %v164, 0
  %vm169 = vcmask 1043456
  %v171 = vsel %vm169, %v147, 0
  %173 = vmatprep.subr.bf16.mxu0 0
  %174 = vmatpush1.bf16.msra.mxu0 %v171
  %175 = vmatprep.subr.bf16.mxu0 0
  %176 = vmatpush1.bf16.msra.mxu0 0
  %177 = vmatprep.subr.bf16.mxu0 0
  %178 = vmatpush1.bf16.msra.mxu0 0
  %179 = vmatprep.subr.bf16.mxu0 0
  %180 = vmatpush1.bf16.msra.mxu0 0
  %181 = vmatprep.subr.bf16.mxu0 0
  %182 = vmatpush1.bf16.msra.mxu0 0
  %183 = vmatprep.subr.bf16.mxu0 0
  %184 = vmatpush1.bf16.msra.mxu0 0
  %185 = vmatprep.subr.bf16.mxu0 0
  %186 = vmatpush1.bf16.msra.mxu0 0
  %187 = vmatprep.subr.bf16.mxu0 0
  %188 = vmatpush1.bf16.msra.mxu0 0
  %189 = vmatprep.subr.bf16.mxu0 0
  %190 = vmatpush1.bf16.msra.mxu0 0
  %191 = vmatprep.subr.bf16.mxu0 0
  %192 = vmatpush1.bf16.msra.mxu0 0
  %193 = vmatprep.subr.bf16.mxu0 0
  %194 = vmatpush1.bf16.msra.mxu0 0
  %195 = vmatprep.subr.bf16.mxu0 0
  %196 = vmatpush1.bf16.msra.mxu0 0
  %197 = vmatprep.subr.bf16.mxu0 0
  %198 = vmatpush1.bf16.msra.mxu0 0
  %199 = vmatprep.subr.bf16.mxu0 0
  %200 = vmatpush1.bf16.msra.mxu0 0
  %201 = vmatprep.subr.bf16.mxu0 0
  %202 = vmatpush1.bf16.msra.mxu0 0
  %203 = vmatprep.subr.bf16.mxu0 0
  %204 = vmatpush1.bf16.msra.mxu0 0
  %205 = vmatprep.mubr.bf16.mxu0 0
  %206 = vmatmul.mubr.bf16.gmra.mrb[0].mxu0 %v167
  %v207 = vpop.f32.mrb[0].mxu0
  %v208 = vadd.f32 %v153, %v207
  %v209 = vpop.f32.mrb[0].mxu0
  %v210 = vpop.f32.mrb[0].mxu0
  %v211 = vadd.f32 %v158, %v210
  %v212 = vpop.f32.mrb[0].mxu0
  %213 = vdwg.mxu0
  %v214 = vmax.f32 %v208, 0.0
  %v215 = vmax.f32 %v211, 0.0
  %v216 = vld [vmem:[%s1] sm:$0xff]
  %v217 = vld [vmem:[%s6] sm:$0xff]
  %v218 = vld [vmem:[%s6 + $0x8] sm:$0x1]
  %v219 = vld [vmem:[%s7] sm:$0xff]
  %v220 = vld [vmem:[%s7 + $0x8] sm:$0x1]
  %vm221 = vcmask 130048
  %v223 = vsel %vm221, %v219, 0
  %v226 = vsel %vm221, %v220, 0
  %228 = vmatprep.subr.mxu0 0.0
  %229 = vmatpush1.msra.mxu0 %v214
  %230 = vmatprep.subr.mxu0 0.0
  %231 = vmatpush1.msra.mxu0 %v215
  %232 = vmatprep.subr.mxu0 0.0
  %233 = vmatpush1.msra.mxu0 0.0
  %234 = vmatprep.subr.mxu0 0.0
  %235 = vmatpush1.msra.mxu0 0.0
  %236 = vmatprep.subr.mxu0 0.0
  %237 = vmatpush1.msra.mxu0 0.0
  %238 = vmatprep.subr.mxu0 0.0
  %239 = vmatpush1.msra.mxu0 0.0
  %240 = vmatprep.subr.mxu0 0.0
  %241 = vmatpush1.msra.mxu0 0.0
  %242 = vmatprep.subr.mxu0 0.0
  %243 = vmatpush1.msra.mxu0 0.0
  %244 = vmatprep.subr.mxu0 0.0
  %245 = vmatpush1.msra.mxu0 0.0
  %246 = vmatprep.subr.mxu0 0.0
  %247 = vmatpush1.msra.mxu0 0.0
  %248 = vmatprep.subr.mxu0 0.0
  %249 = vmatpush1.msra.mxu0 0.0
  %250 = vmatprep.subr.mxu0 0.0
  %251 = vmatpush1.msra.mxu0 0.0
  %252 = vmatprep.subr.mxu0 0.0
  %253 = vmatpush1.msra.mxu0 0.0
  %254 = vmatprep.subr.mxu0 0.0
  %255 = vmatpush1.msra.mxu0 0.0
  %256 = vmatprep.subr.mxu0 0.0
  %257 = vmatpush1.msra.mxu0 0.0
  %258 = vmatprep.subr.mxu0 0.0
  %259 = vmatpush1.msra.mxu0 0.0
  %260 = vmatprep.subr.mxu0 0.0
  %261 = vmatpush1.msra.mxu0 0.0
  %262 = vmatprep.subr.mxu0 0.0
  %263 = vmatpush1.msra.mxu0 0.0
  %264 = vmatprep.subr.mxu0 0.0
  %265 = vmatpush1.msra.mxu0 0.0
  %266 = vmatprep.subr.mxu0 0.0
  %267 = vmatpush1.msra.mxu0 0.0
  %268 = vmatprep.subr.mxu0 0.0
  %269 = vmatpush1.msra.mxu0 0.0
  %270 = vmatprep.subr.mxu0 0.0
  %271 = vmatpush1.msra.mxu0 0.0
  %272 = vmatprep.subr.mxu0 0.0
  %273 = vmatpush1.msra.mxu0 0.0
  %274 = vmatprep.subr.mxu0 0.0
  %275 = vmatpush1.msra.mxu0 0.0
  %276 = vmatprep.subr.mxu0 0.0
  %277 = vmatpush1.msra.mxu0 0.0
  %278 = vmatprep.subr.mxu0 0.0
  %279 = vmatpush1.msra.mxu0 0.0
  %280 = vmatprep.subr.mxu0 0.0
  %281 = vmatpush1.msra.mxu0 0.0
  %282 = vmatprep.subr.mxu0 0.0
  %283 = vmatpush1.msra.mxu0 0.0
  %284 = vmatprep.subr.mxu0 0.0
  %285 = vmatpush1.msra.mxu0 0.0
  %286 = vmatprep.subr.mxu0 0.0
  %287 = vmatpush1.msra.mxu0 0.0
  %288 = vmatprep.subr.mxu0 0.0
  %289 = vmatpush1.msra.mxu0 0.0
  %290 = vmatprep.subr.mxu0 0.0
  %291 = vmatpush1.msra.mxu0 0.0
  %292 = vmatprep.mubr.f32.mxu0 0.0
  %293 = vmatmul.mubr.f32.gmra.mrb[0].mxu0 %v223
  %v294 = vpop.f32.mrb[0].mxu0
  %v295 = vadd.f32 0.0, %v294
  %v296 = vpop.f32.mrb[0].mxu0
  %297 = vmatprep.mubr.f32.mxu0 0.0
  %298 = vmatmul.mubr.f32.gmra.mrb[0].mxu0 %v226
  %v299 = vpop.f32.mrb[0].mxu0
  %v300 = vadd.f32 0.0, %v299
  %v301 = vpop.f32.mrb[0].mxu0
  %302 = vdwg.mxu0
  %v304 = vsel %vm165, %v217, 0
  %v307 = vsel %vm165, %v218, 0
  %309 = vmatprep.subr.mxu0 0.0
  %310 = vmatpush1.msra.mxu0 %v216
  %311 = vmatprep.subr.mxu0 0.0
  %312 = vmatpush1.msra.mxu0 0.0
  %313 = vmatprep.subr.mxu0 0.0
  %314 = vmatpush1.msra.mxu0 0.0
  %315 = vmatprep.subr.mxu0 0.0
  %316 = vmatpush1.msra.mxu0 0.0
  %317 = vmatprep.subr.mxu0 0.0
  %318 = vmatpush1.msra.mxu0 0.0
  %319 = vmatprep.subr.mxu0 0.0
  %320 = vmatpush1.msra.mxu0 0.0
  %321 = vmatprep.subr.mxu0 0.0
  %322 = vmatpush1.msra.mxu0 0.0
  %323 = vmatprep.subr.mxu0 0.0
  %324 = vmatpush1.msra.mxu0 0.0
  %325 = vmatprep.subr.mxu0 0.0
  %326 = vmatpush1.msra.mxu0 0.0
  %327 = vmatprep.subr.mxu0 0.0
  %328 = vmatpush1.msra.mxu0 0.0
  %329 = vmatprep.subr.mxu0 0.0
  %330 = vmatpush1.msra.mxu0 0.0
  %331 = vmatprep.subr.mxu0 0.0
  %332 = vmatpush1.msra.mxu0 0.0
  %333 = vmatprep.subr.mxu0 0.0
  %334 = vmatpush1.msra.mxu0 0.0
  %335 = vmatprep.subr.mxu0 0.0
  %336 = vmatpush1.msra.mxu0 0.0
  %337 = vmatprep.subr.mxu0 0.0
  %338 = vmatpush1.msra.mxu0 0.0
  %339 = vmatprep.subr.mxu0 0.0
  %340 = vmatpush1.msra.mxu0 0.0
  %341 = vmatprep.subr.mxu0 0.0
  %342 = vmatpush1.msra.mxu0 0.0
  %343 = vmatprep.subr.mxu0 0.0
  %344 = vmatpush1.msra.mxu0 0.0
  %345 = vmatprep.subr.mxu0 0.0
  %346 = vmatpush1.msra.mxu0 0.0
  %347 = vmatprep.subr.mxu0 0.0
  %348 = vmatpush1.msra.mxu0 0.0
  %349 = vmatprep.subr.mxu0 0.0
  %350 = vmatpush1.msra.mxu0 0.0
  %351 = vmatprep.subr.mxu0 0.0
  %352 = vmatpush1.msra.mxu0 0.0
  %353 = vmatprep.subr.mxu0 0.0
  %354 = vmatpush1.msra.mxu0 0.0
  %355 = vmatprep.subr.mxu0 0.0
  %356 = vmatpush1.msra.mxu0 0.0
  %357 = vmatprep.subr.mxu0 0.0
  %358 = vmatpush1.msra.mxu0 0.0
  %359 = vmatprep.subr.mxu0 0.0
  %360 = vmatpush1.msra.mxu0 0.0
  %361 = vmatprep.subr.mxu0 0.0
  %362 = vmatpush1.msra.mxu0 0.0
  %363 = vmatprep.subr.mxu0 0.0
  %364 = vmatpush1.msra.mxu0 0.0
  %365 = vmatprep.subr.mxu0 0.0
  %366 = vmatpush1.msra.mxu0 0.0
  %367 = vmatprep.subr.mxu0 0.0
  %368 = vmatpush1.msra.mxu0 0.0
  %369 = vmatprep.subr.mxu0 0.0
  %370 = vmatpush1.msra.mxu0 0.0
  %371 = vmatprep.subr.mxu0 0.0
  %372 = vmatpush1.msra.mxu0 0.0
  %373 = vmatprep.mubr.f32.mxu0 0.0
  %374 = vmatmul.mubr.f32.gmra.mrb[0].mxu0 %v304
  %v375 = vpop.f32.mrb[0].mxu0
  %v376 = vadd.f32 %v295, %v375
  %v377 = vpop.f32.mrb[0].mxu0
  %378 = vmatprep.mubr.f32.mxu0 0.0
  %379 = vmatmul.mubr.f32.gmra.mrb[0].mxu0 %v307
  %v380 = vpop.f32.mrb[0].mxu0
  %v381 = vadd.f32 %v300, %v380
  %v382 = vpop.f32.mrb[0].mxu0
  %383 = vdwg.mxu0
  %v384 = vld [vmem:[%s8] sm:$0xff]
  %v385 = vmul.f32 %v216, %v216
  %387 = vset.pattern.permute.xlu0 0
  %388 = vperm.xlu0 %387, %v384
  %v389 = vpop.permute.xlu0 %388
  %v391 = vmul.f32 %v389, %v385
  %v392 = vrot.slane %v391, 4
  %v393 = vadd.f32 %v391, %v392
  %v394 = vrot.slane %v393, 2
  %v395 = vadd.f32 %v393, %v394
  %v396 = vrot.slane %v395, 1
  %v397 = vadd.f32 %v395, %v396
  %v398 = vld [vmem:[%s9] sm:$0xff]
  %v399 = vld [vmem:[%s9 + $0x8] sm:$0xff]
  %v400 = vmul.f32 %v214, %v214
  %v401 = vmul.f32 %v215, %v215
  %403 = vset.pattern.permute.xlu0 0
  %404 = vperm.xlu0 %403, %v398
  %v405 = vpop.permute.xlu0 %404
  %408 = vset.pattern.permute.xlu0 0
  %409 = vperm.xlu0 %408, %v399
  %v410 = vpop.permute.xlu0 %409
  %v412 = vmul.f32 %v405, %v400
  %v413 = vmul.f32 %v410, %v401
  %v414 = vadd.f32 %v412, %v413
  %v415 = vrot.slane %v414, 4
  %v416 = vadd.f32 %v414, %v415
  %v417 = vrot.slane %v416, 2
  %v418 = vadd.f32 %v416, %v417
  %v419 = vrot.slane %v418, 1
  %v420 = vadd.f32 %v418, %v419
  %v421 = vadd.f32 %v397, %v420
  %v422 = vmul.f32 %v376, %v376
  %v423 = vrot.slane %v422, 4
  %v424 = vadd.f32 %v422, %v423
  %v425 = vrot.slane %v424, 2
  %v426 = vadd.f32 %v424, %v425
  %v427 = vrot.slane %v426, 1
  %v428 = vadd.f32 %v426, %v427
  %v429 = vsub.f32 %v428, %v421
  %s430 = sld [smem:[#allocation2]]
  %v431 = vstv %s430
  %v432 = vadd.f32 %v381, %v431
  %v433 = vmul.f32 %v429, 0.5
  %v434 = vadd.f32 %v432, %v433
  %435 = vst [vmem:[%s11] sm:$0x1] %v434
  // Predicated region
  $region46: #{deepconn_forward.1} parent=0 // pred_check
    _
  $region47: #{deepconn_forward.1} parent=0 // pred_check_branch
    %437 = sbr.rel (0) target = $region49
  $region48: #{deepconn_forward.1} parent=0 // pred_region
    _
  $region49: #{deepconn_forward.1} parent=0 // pred_fallthru
    _
  // Predicated region
  $region50: #{deepconn_forward.1} parent=0 // pred_check
    _
  $region51: #{deepconn_forward.1} parent=0 // pred_check_branch
    %439 = sbr.rel (0) target = $region53
  $region52: #{deepconn_forward.1} parent=0 // pred_region
    _
  $region53: #{deepconn_forward.1} parent=0 // pred_fallthru
    _

</llo_original>
